<compile_context>
chip_gen: v7x
topology: tpu7x:2x2x1
jax: 0.10.0
libtpu: 0.0.40
codegen_flags: <defaults>
</compile_context>

<pallas_src>
import jax
import jax.numpy as jnp
from jax.experimental import pallas as pl
from jax.experimental.pallas import tpu as pltpu


# ----------------------------------------------------------------------------
# Kernel factory (layer counts are static Python ints, baked in at trace time)
# ----------------------------------------------------------------------------
def make_cvae_kernel(n_emb_enc, n_enc, n_dec):
    """n_emb_enc / n_enc / n_dec = number of Linear layers in
    embedding.encoder / encoder / decoder respectively."""

    def kernel(*refs):
        it = iter(refs)
        x_ref, xm_ref, eps_ref = next(it), next(it), next(it)

        emb_enc = [(next(it), next(it)) for _ in range(n_emb_enc)]
        emb_head = (next(it), next(it))
        enc0 = (next(it), next(it), next(it))                  # Wx, We, b
        enc_rest = [(next(it), next(it)) for _ in range(n_enc - 1)]
        w_mu = (next(it), next(it))
        w_sig = (next(it), next(it))
        dec0 = (next(it), next(it), next(it))                  # Wz, We, b
        dec_rest = [(next(it), next(it)) for _ in range(n_dec - 1)]

        out_ref, mu_ref, sigma_ref = next(it), next(it), next(it)

        f32 = jnp.float32

        def linear(a, w_ref, b_ref):
            return jnp.dot(a, w_ref[...], preferred_element_type=f32) + b_ref[...]

        def relu(a):
            return jnp.maximum(a, 0.0)

        # ---- embedding = CondVariationalEmbedding(x_mean) -------------------
        h = xm_ref[...]
        for (w, b) in emb_enc:                      # Linear + ReLU per layer
            h = relu(linear(h, w, b))
        emb = relu(linear(h, *emb_head))            # head Linear + ReLU

        # ---- encoder(cat([x_in, emb])) : split-weight form -------------------
        wx, we, b0 = enc0
        h = (jnp.dot(x_ref[...], wx[...], preferred_element_type=f32)
             + jnp.dot(emb, we[...], preferred_element_type=f32) + b0[...])
        h = relu(h)
        for (w, b) in enc_rest:
            h = relu(linear(h, w, b))

        # ---- mu / sigma heads + reparameterization ---------------------------
        mu = linear(h, *w_mu)
        sigma = jnp.exp(linear(h, *w_sig))
        z = mu + sigma * eps_ref[...]

        # ---- decoder(cat([z, emb])) : split-weight form -----------------------
        wz, wde, bd0 = dec0
        h = (jnp.dot(z, wz[...], preferred_element_type=f32)
             + jnp.dot(emb, wde[...], preferred_element_type=f32) + bd0[...])
        if n_dec > 1:                               # ReLU after all but last layer
            h = relu(h)
        for li, (w, b) in enumerate(dec_rest):
            h = linear(h, w, b)
            if li < len(dec_rest) - 1:
                h = relu(h)

        out_ref[...] = h
        mu_ref[...] = mu
        sigma_ref[...] = sigma

    return kernel


# ----------------------------------------------------------------------------
# Wrapper
# ----------------------------------------------------------------------------
def _pick_tb(batch, cap=256):
    """Batch-tile size: whole batch if small, else a sublane-multiple tile
    that divides the batch (keeps blocks exact, no partial-block padding)."""
    if batch <= cap or batch % 8 != 0:
        return batch
    tb = cap - (cap % 8)
    while batch % tb != 0:
        tb -= 8
    return tb


def cvae_forward(x, x_mean, eps, params, latent_dim):
    """Returns (out, mu, sigma) with out reshaped to x.shape."""
    B = x.shape[0]
    x_in = x.reshape(B, -1).astype(jnp.float32)
    xm = x_mean.reshape(B, -1).astype(jnp.float32)
    input_dim = x_in.shape[1]

    def as2d(b):
        return b.reshape(1, -1)

    # Split the concat-consuming first layers (wrapper-side layout plumbing).
    enc_w0, enc_b0 = params["enc"][0]
    enc_w0x, enc_w0e = enc_w0[:input_dim], enc_w0[input_dim:]
    dec_w0, dec_b0 = params["dec"][0]
    dec_w0z, dec_w0e = dec_w0[:latent_dim], dec_w0[latent_dim:]

    weight_inputs = []
    for (w, b) in params["emb_enc"]:
        weight_inputs += [w, as2d(b)]
    weight_inputs += [params["emb_head"][0], as2d(params["emb_head"][1])]
    weight_inputs += [enc_w0x, enc_w0e, as2d(enc_b0)]
    for (w, b) in params["enc"][1:]:
        weight_inputs += [w, as2d(b)]
    weight_inputs += [params["mu"][0], as2d(params["mu"][1]),
                      params["sigma"][0], as2d(params["sigma"][1])]
    weight_inputs += [dec_w0z, dec_w0e, as2d(dec_b0)]
    for (w, b) in params["dec"][1:]:
        weight_inputs += [w, as2d(b)]

    TB = _pick_tb(B)
    grid = (pl.cdiv(B, TB),)

    def batched_spec(d):
        return pl.BlockSpec((TB, d), lambda i: (i, 0))

    def resident_spec(a):
        return pl.BlockSpec(a.shape, lambda i: (0,) * a.ndim)

    in_specs = [batched_spec(input_dim), batched_spec(xm.shape[1]),
                batched_spec(latent_dim)]
    in_specs += [resident_spec(a) for a in weight_inputs]

    out_specs = (batched_spec(input_dim),
                 batched_spec(latent_dim),
                 batched_spec(latent_dim))
    out_shape = (jax.ShapeDtypeStruct((B, input_dim), jnp.float32),
                 jax.ShapeDtypeStruct((B, latent_dim), jnp.float32),
                 jax.ShapeDtypeStruct((B, latent_dim), jnp.float32))

    kernel = make_cvae_kernel(len(params["emb_enc"]),
                              len(params["enc"]),
                              len(params["dec"]))

    out, mu, sigma = pl.pallas_call(
        kernel,
        grid=grid,
        in_specs=in_specs,
        out_specs=out_specs,
        out_shape=out_shape,
        compiler_params=pltpu.CompilerParams(
            dimension_semantics=("parallel",)),
    )(x_in, xm, eps, *weight_inputs)

    return out.reshape(x.shape), mu, sigma


# ----------------------------------------------------------------------------
# Parameters (matches the PyTorch constructor's dimension bookkeeping)
# ----------------------------------------------------------------------------
def init_params(key, input_dim, encoder_hidden_dims):
    latent_dim = encoder_hidden_dims[-1]
    encoder_dims = [input_dim + latent_dim, *encoder_hidden_dims[:-1]]
    embedding_dims = [input_dim, *encoder_hidden_dims[:-1]]
    decoder_hidden_dims = encoder_hidden_dims[::-1][1:]
    decoder_dims = [latent_dim * 2, *decoder_hidden_dims, input_dim]

    keys = iter(jax.random.split(key, 64))

    def linear(d_in, d_out):
        s = float(d_in) ** -0.5
        w = s * jax.random.normal(next(keys), (d_in, d_out), jnp.float32)
        b = s * jax.random.normal(next(keys), (d_out,), jnp.float32)
        return (w, b)

    params = {
        "emb_enc": [linear(a, b) for a, b in zip(embedding_dims[:-1], embedding_dims[1:])],
        "emb_head": linear(embedding_dims[-1], latent_dim),
        "enc": [linear(a, b) for a, b in zip(encoder_dims[:-1], encoder_dims[1:])],
        "mu": linear(encoder_dims[-1], latent_dim),
        "sigma": linear(encoder_dims[-1], latent_dim),
        "dec": [linear(a, b) for a, b in zip(decoder_dims[:-1], decoder_dims[1:])],
    }
    return params, latent_dim


# ----------------------------------------------------------------------------
# Pure-JAX reference (mirrors the PyTorch forward exactly, same eps)
# ----------------------------------------------------------------------------
def cvae_forward_ref(x, x_mean, eps, params):
    B = x.shape[0]
    x_in = x.reshape(B, -1)
    xm = x_mean.reshape(B, -1)
    relu = lambda a: jnp.maximum(a, 0.0)

    h = xm
    for (w, b) in params["emb_enc"]:
        h = relu(h @ w + b)
    emb = relu(h @ params["emb_head"][0] + params["emb_head"][1])

    h = jnp.concatenate([x_in, emb], axis=1)
    for (w, b) in params["enc"]:
        h = relu(h @ w + b)

    mu = h @ params["mu"][0] + params["mu"][1]
    sigma = jnp.exp(h @ params["sigma"][0] + params["sigma"][1])
    z = mu + sigma * eps

    h = jnp.concatenate([z, emb], axis=1)
    n_dec = len(params["dec"])
    for i, (w, b) in enumerate(params["dec"]):
        h = h @ w + b
        if i < n_dec - 1:
            h = relu(h)
    return h.reshape(x.shape), mu, sigma


if __name__ == "__main__":
    # Small config: x is (B, 4, 4) -> flattened input_dim = 16,
    # encoder_hidden_dims = [32, 8] -> latent_dim = 8,
    # decoder_dims = [16, 32, 16].
    B, C, S = 2, 4, 4
    ENC_HIDDEN = [32, 8]

    key = jax.random.PRNGKey(0)
    kx, km, kp, ke, kbig = jax.random.split(key, 5)
    x = jax.random.normal(kx, (B, C, S), jnp.float32)
    x_mean = jax.random.normal(km, (B, C, S), jnp.float32)
    params, latent_dim = init_params(kp, C * S, ENC_HIDDEN)
    eps = jax.random.normal(ke, (B, latent_dim), jnp.float32)

    out, mu, sigma = cvae_forward(x, x_mean, eps, params, latent_dim)
    out = jax.block_until_ready(out)
    mu = jax.block_until_ready(mu)
    sigma = jax.block_until_ready(sigma)

    out_ref, mu_ref, sigma_ref = cvae_forward_ref(x, x_mean, eps, params)
    assert out.shape == x.shape
    assert mu.shape == (B, latent_dim) and sigma.shape == (B, latent_dim)
    assert jnp.allclose(out, out_ref, atol=1e-5, rtol=1e-5)
    assert jnp.allclose(mu, mu_ref, atol=1e-5, rtol=1e-5)
    assert jnp.allclose(sigma, sigma_ref, atol=1e-5, rtol=1e-5)

    # Exercise the batched grid path (TB=256, grid=2, weights VMEM-resident).
    B2 = 512
    kx2, km2, ke2 = jax.random.split(kbig, 3)
    x2 = jax.random.normal(kx2, (B2, C, S), jnp.float32)
    xm2 = jax.random.normal(km2, (B2, C, S), jnp.float32)
    eps2 = jax.random.normal(ke2, (B2, latent_dim), jnp.float32)
    out2, mu2, sigma2 = cvae_forward(x2, xm2, eps2, params, latent_dim)
    out2 = jax.block_until_ready(out2)
    out2_ref, mu2_ref, sigma2_ref = cvae_forward_ref(x2, xm2, eps2, params)
    assert jnp.allclose(out2, out2_ref, atol=1e-5, rtol=1e-5)
    assert jnp.allclose(mu2, mu2_ref, atol=1e-5, rtol=1e-5)
    assert jnp.allclose(sigma2, sigma2_ref, atol=1e-5, rtol=1e-5)

    print("KERNEL_OK")
</pallas_src>

<mosaic_0001>
module attributes {stable_mosaic.version = 11 : i64} {
  func.func @kernel(%arg0: i32, %arg1: memref<2x16xf32, #tpu.memory_space<vmem>>, %arg2: memref<2x16xf32, #tpu.memory_space<vmem>>, %arg3: memref<2x8xf32, #tpu.memory_space<vmem>>, %arg4: memref<16x32xf32, #tpu.memory_space<vmem>>, %arg5: memref<1x32xf32, #tpu.memory_space<vmem>>, %arg6: memref<32x8xf32, #tpu.memory_space<vmem>>, %arg7: memref<1x8xf32, #tpu.memory_space<vmem>>, %arg8: memref<16x32xf32, #tpu.memory_space<vmem>>, %arg9: memref<8x32xf32, #tpu.memory_space<vmem>>, %arg10: memref<1x32xf32, #tpu.memory_space<vmem>>, %arg11: memref<32x8xf32, #tpu.memory_space<vmem>>, %arg12: memref<1x8xf32, #tpu.memory_space<vmem>>, %arg13: memref<32x8xf32, #tpu.memory_space<vmem>>, %arg14: memref<1x8xf32, #tpu.memory_space<vmem>>, %arg15: memref<8x32xf32, #tpu.memory_space<vmem>>, %arg16: memref<8x32xf32, #tpu.memory_space<vmem>>, %arg17: memref<1x32xf32, #tpu.memory_space<vmem>>, %arg18: memref<32x16xf32, #tpu.memory_space<vmem>>, %arg19: memref<1x16xf32, #tpu.memory_space<vmem>>, %arg20: memref<2x16xf32, #tpu.memory_space<vmem>>, %arg21: memref<2x8xf32, #tpu.memory_space<vmem>>, %arg22: memref<2x8xf32, #tpu.memory_space<vmem>>) attributes {dimension_semantics = [#tpu.dimension_semantics<parallel>], iteration_bounds = array<i64: 1>, scalar_prefetch = 0 : i64, scratch_operands = 0 : i64, tpu.core_type = #tpu.core_type<tc>, window_params = [{transform_indices = @transform_0, window_bounds = array<i64: 2, 16>}, {transform_indices = @transform_1, window_bounds = array<i64: 2, 16>}, {transform_indices = @transform_2, window_bounds = array<i64: 2, 8>}, {pipeline_mode = #tpu.pipeline_mode<synchronous>, transform_indices = @transform_3, window_bounds = array<i64: 16, 32>}, {pipeline_mode = #tpu.pipeline_mode<synchronous>, transform_indices = @transform_4, window_bounds = array<i64: 1, 32>}, {pipeline_mode = #tpu.pipeline_mode<synchronous>, transform_indices = @transform_5, window_bounds = array<i64: 32, 8>}, {pipeline_mode = #tpu.pipeline_mode<synchronous>, transform_indices = @transform_6, window_bounds = array<i64: 1, 8>}, {pipeline_mode = #tpu.pipeline_mode<synchronous>, transform_indices = @transform_7, window_bounds = array<i64: 16, 32>}, {pipeline_mode = #tpu.pipeline_mode<synchronous>, transform_indices = @transform_8, window_bounds = array<i64: 8, 32>}, {pipeline_mode = #tpu.pipeline_mode<synchronous>, transform_indices = @transform_9, window_bounds = array<i64: 1, 32>}, {pipeline_mode = #tpu.pipeline_mode<synchronous>, transform_indices = @transform_10, window_bounds = array<i64: 32, 8>}, {pipeline_mode = #tpu.pipeline_mode<synchronous>, transform_indices = @transform_11, window_bounds = array<i64: 1, 8>}, {pipeline_mode = #tpu.pipeline_mode<synchronous>, transform_indices = @transform_12, window_bounds = array<i64: 32, 8>}, {pipeline_mode = #tpu.pipeline_mode<synchronous>, transform_indices = @transform_13, window_bounds = array<i64: 1, 8>}, {pipeline_mode = #tpu.pipeline_mode<synchronous>, transform_indices = @transform_14, window_bounds = array<i64: 8, 32>}, {pipeline_mode = #tpu.pipeline_mode<synchronous>, transform_indices = @transform_15, window_bounds = array<i64: 8, 32>}, {pipeline_mode = #tpu.pipeline_mode<synchronous>, transform_indices = @transform_16, window_bounds = array<i64: 1, 32>}, {pipeline_mode = #tpu.pipeline_mode<synchronous>, transform_indices = @transform_17, window_bounds = array<i64: 32, 16>}, {pipeline_mode = #tpu.pipeline_mode<synchronous>, transform_indices = @transform_18, window_bounds = array<i64: 1, 16>}, {transform_indices = @transform_19, window_bounds = array<i64: 2, 16>}, {transform_indices = @transform_20, window_bounds = array<i64: 2, 8>}, {transform_indices = @transform_21, window_bounds = array<i64: 2, 8>}]} {
    %c0 = arith.constant 0 : index
    %c0_0 = arith.constant 0 : index
    %0 = vector.load %arg2[%c0, %c0_0] : memref<2x16xf32, #tpu.memory_space<vmem>>, vector<2x16xf32>
    %c0_1 = arith.constant 0 : index
    %c0_2 = arith.constant 0 : index
    %1 = vector.load %arg4[%c0_1, %c0_2] : memref<16x32xf32, #tpu.memory_space<vmem>>, vector<16x32xf32>
    %cst = arith.constant dense<0.000000e+00> : vector<2x32xf32>
    %2 = tpu.matmul %0, %1, %cst {dimension_numbers = #tpu.dot_dimension_numbers<[1], [0], [0], [1], [0, 0, 1, 1], [], []>} : vector<2x16xf32>, vector<16x32xf32>, vector<2x32xf32> -> vector<2x32xf32>
    %c0_3 = arith.constant 0 : index
    %c0_4 = arith.constant 0 : index
    %3 = vector.load %arg5[%c0_3, %c0_4] : memref<1x32xf32, #tpu.memory_space<vmem>>, vector<1x32xf32>
    %4 = vector.broadcast %3 : vector<1x32xf32> to vector<2x32xf32>
    %5 = arith.addf %2, %4 : vector<2x32xf32>
    %cst_5 = arith.constant 0.000000e+00 : f32
    %6 = vector.broadcast %cst_5 : f32 to vector<2x32xf32>
    %7 = arith.maximumf %5, %6 : vector<2x32xf32>
    %c0_6 = arith.constant 0 : index
    %c0_7 = arith.constant 0 : index
    %8 = vector.load %arg6[%c0_6, %c0_7] : memref<32x8xf32, #tpu.memory_space<vmem>>, vector<32x8xf32>
    %cst_8 = arith.constant dense<0.000000e+00> : vector<2x8xf32>
    %9 = tpu.matmul %7, %8, %cst_8 {dimension_numbers = #tpu.dot_dimension_numbers<[1], [0], [0], [1], [0, 0, 1, 1], [], []>} : vector<2x32xf32>, vector<32x8xf32>, vector<2x8xf32> -> vector<2x8xf32>
    %c0_9 = arith.constant 0 : index
    %c0_10 = arith.constant 0 : index
    %10 = vector.load %arg7[%c0_9, %c0_10] : memref<1x8xf32, #tpu.memory_space<vmem>>, vector<1x8xf32>
    %11 = vector.broadcast %10 : vector<1x8xf32> to vector<2x8xf32>
    %12 = arith.addf %9, %11 : vector<2x8xf32>
    %cst_11 = arith.constant 0.000000e+00 : f32
    %13 = vector.broadcast %cst_11 : f32 to vector<2x8xf32>
    %14 = arith.maximumf %12, %13 : vector<2x8xf32>
    %c0_12 = arith.constant 0 : index
    %c0_13 = arith.constant 0 : index
    %15 = vector.load %arg1[%c0_12, %c0_13] : memref<2x16xf32, #tpu.memory_space<vmem>>, vector<2x16xf32>
    %c0_14 = arith.constant 0 : index
    %c0_15 = arith.constant 0 : index
    %16 = vector.load %arg8[%c0_14, %c0_15] : memref<16x32xf32, #tpu.memory_space<vmem>>, vector<16x32xf32>
    %cst_16 = arith.constant dense<0.000000e+00> : vector<2x32xf32>
    %17 = tpu.matmul %15, %16, %cst_16 {dimension_numbers = #tpu.dot_dimension_numbers<[1], [0], [0], [1], [0, 0, 1, 1], [], []>} : vector<2x16xf32>, vector<16x32xf32>, vector<2x32xf32> -> vector<2x32xf32>
    %c0_17 = arith.constant 0 : index
    %c0_18 = arith.constant 0 : index
    %18 = vector.load %arg9[%c0_17, %c0_18] : memref<8x32xf32, #tpu.memory_space<vmem>>, vector<8x32xf32>
    %cst_19 = arith.constant dense<0.000000e+00> : vector<2x32xf32>
    %19 = tpu.matmul %14, %18, %cst_19 {dimension_numbers = #tpu.dot_dimension_numbers<[1], [0], [0], [1], [0, 0, 1, 1], [], []>} : vector<2x8xf32>, vector<8x32xf32>, vector<2x32xf32> -> vector<2x32xf32>
    %20 = arith.addf %17, %19 : vector<2x32xf32>
    %c0_20 = arith.constant 0 : index
    %c0_21 = arith.constant 0 : index
    %21 = vector.load %arg10[%c0_20, %c0_21] : memref<1x32xf32, #tpu.memory_space<vmem>>, vector<1x32xf32>
    %22 = vector.broadcast %21 : vector<1x32xf32> to vector<2x32xf32>
    %23 = arith.addf %20, %22 : vector<2x32xf32>
    %cst_22 = arith.constant 0.000000e+00 : f32
    %24 = vector.broadcast %cst_22 : f32 to vector<2x32xf32>
    %25 = arith.maximumf %23, %24 : vector<2x32xf32>
    %c0_23 = arith.constant 0 : index
    %c0_24 = arith.constant 0 : index
    %26 = vector.load %arg11[%c0_23, %c0_24] : memref<32x8xf32, #tpu.memory_space<vmem>>, vector<32x8xf32>
    %cst_25 = arith.constant dense<0.000000e+00> : vector<2x8xf32>
    %27 = tpu.matmul %25, %26, %cst_25 {dimension_numbers = #tpu.dot_dimension_numbers<[1], [0], [0], [1], [0, 0, 1, 1], [], []>} : vector<2x32xf32>, vector<32x8xf32>, vector<2x8xf32> -> vector<2x8xf32>
    %c0_26 = arith.constant 0 : index
    %c0_27 = arith.constant 0 : index
    %28 = vector.load %arg12[%c0_26, %c0_27] : memref<1x8xf32, #tpu.memory_space<vmem>>, vector<1x8xf32>
    %29 = vector.broadcast %28 : vector<1x8xf32> to vector<2x8xf32>
    %30 = arith.addf %27, %29 : vector<2x8xf32>
    %c0_28 = arith.constant 0 : index
    %c0_29 = arith.constant 0 : index
    %31 = vector.load %arg13[%c0_28, %c0_29] : memref<32x8xf32, #tpu.memory_space<vmem>>, vector<32x8xf32>
    %cst_30 = arith.constant dense<0.000000e+00> : vector<2x8xf32>
    %32 = tpu.matmul %25, %31, %cst_30 {dimension_numbers = #tpu.dot_dimension_numbers<[1], [0], [0], [1], [0, 0, 1, 1], [], []>} : vector<2x32xf32>, vector<32x8xf32>, vector<2x8xf32> -> vector<2x8xf32>
    %c0_31 = arith.constant 0 : index
    %c0_32 = arith.constant 0 : index
    %33 = vector.load %arg14[%c0_31, %c0_32] : memref<1x8xf32, #tpu.memory_space<vmem>>, vector<1x8xf32>
    %34 = vector.broadcast %33 : vector<1x8xf32> to vector<2x8xf32>
    %35 = arith.addf %32, %34 : vector<2x8xf32>
    %36 = math.exp %35 : vector<2x8xf32>
    %c0_33 = arith.constant 0 : index
    %c0_34 = arith.constant 0 : index
    %37 = vector.load %arg3[%c0_33, %c0_34] : memref<2x8xf32, #tpu.memory_space<vmem>>, vector<2x8xf32>
    %38 = arith.mulf %36, %37 : vector<2x8xf32>
    %39 = arith.addf %30, %38 : vector<2x8xf32>
    %c0_35 = arith.constant 0 : index
    %c0_36 = arith.constant 0 : index
    %40 = vector.load %arg15[%c0_35, %c0_36] : memref<8x32xf32, #tpu.memory_space<vmem>>, vector<8x32xf32>
    %cst_37 = arith.constant dense<0.000000e+00> : vector<2x32xf32>
    %41 = tpu.matmul %39, %40, %cst_37 {dimension_numbers = #tpu.dot_dimension_numbers<[1], [0], [0], [1], [0, 0, 1, 1], [], []>} : vector<2x8xf32>, vector<8x32xf32>, vector<2x32xf32> -> vector<2x32xf32>
    %c0_38 = arith.constant 0 : index
    %c0_39 = arith.constant 0 : index
    %42 = vector.load %arg16[%c0_38, %c0_39] : memref<8x32xf32, #tpu.memory_space<vmem>>, vector<8x32xf32>
    %cst_40 = arith.constant dense<0.000000e+00> : vector<2x32xf32>
    %43 = tpu.matmul %14, %42, %cst_40 {dimension_numbers = #tpu.dot_dimension_numbers<[1], [0], [0], [1], [0, 0, 1, 1], [], []>} : vector<2x8xf32>, vector<8x32xf32>, vector<2x32xf32> -> vector<2x32xf32>
    %44 = arith.addf %41, %43 : vector<2x32xf32>
    %c0_41 = arith.constant 0 : index
    %c0_42 = arith.constant 0 : index
    %45 = vector.load %arg17[%c0_41, %c0_42] : memref<1x32xf32, #tpu.memory_space<vmem>>, vector<1x32xf32>
    %46 = vector.broadcast %45 : vector<1x32xf32> to vector<2x32xf32>
    %47 = arith.addf %44, %46 : vector<2x32xf32>
    %cst_43 = arith.constant 0.000000e+00 : f32
    %48 = vector.broadcast %cst_43 : f32 to vector<2x32xf32>
    %49 = arith.maximumf %47, %48 : vector<2x32xf32>
    %c0_44 = arith.constant 0 : index
    %c0_45 = arith.constant 0 : index
    %50 = vector.load %arg18[%c0_44, %c0_45] : memref<32x16xf32, #tpu.memory_space<vmem>>, vector<32x16xf32>
    %cst_46 = arith.constant dense<0.000000e+00> : vector<2x16xf32>
    %51 = tpu.matmul %49, %50, %cst_46 {dimension_numbers = #tpu.dot_dimension_numbers<[1], [0], [0], [1], [0, 0, 1, 1], [], []>} : vector<2x32xf32>, vector<32x16xf32>, vector<2x16xf32> -> vector<2x16xf32>
    %c0_47 = arith.constant 0 : index
    %c0_48 = arith.constant 0 : index
    %52 = vector.load %arg19[%c0_47, %c0_48] : memref<1x16xf32, #tpu.memory_space<vmem>>, vector<1x16xf32>
    %53 = vector.broadcast %52 : vector<1x16xf32> to vector<2x16xf32>
    %54 = arith.addf %51, %53 : vector<2x16xf32>
    %c0_49 = arith.constant 0 : index
    %c0_50 = arith.constant 0 : index
    %55 = vector.load %arg20[%c0_49, %c0_50] : memref<2x16xf32, #tpu.memory_space<vmem>>, vector<2x16xf32>
    tpu.vector_store %arg20[%c0_49, %c0_50], %54 {strides = array<i32>} : memref<2x16xf32, #tpu.memory_space<vmem>>, vector<2x16xf32>,
    %c0_51 = arith.constant 0 : index
    %c0_52 = arith.constant 0 : index
    %56 = vector.load %arg21[%c0_51, %c0_52] : memref<2x8xf32, #tpu.memory_space<vmem>>, vector<2x8xf32>
    tpu.vector_store %arg21[%c0_51, %c0_52], %30 {strides = array<i32>} : memref<2x8xf32, #tpu.memory_space<vmem>>, vector<2x8xf32>,
    %c0_53 = arith.constant 0 : index
    %c0_54 = arith.constant 0 : index
    %57 = vector.load %arg22[%c0_53, %c0_54] : memref<2x8xf32, #tpu.memory_space<vmem>>, vector<2x8xf32>
    tpu.vector_store %arg22[%c0_53, %c0_54], %36 {strides = array<i32>} : memref<2x8xf32, #tpu.memory_space<vmem>>, vector<2x8xf32>,
    return
  }
  func.func @transform_0(%arg0: i32) -> (i32, i32) {
    %c0_i32 = arith.constant 0 : i32
    %c0_i32_0 = arith.constant 0 : i32
    return %arg0, %c0_i32 : i32, i32
  }
  func.func @transform_1(%arg0: i32) -> (i32, i32) {
    %c0_i32 = arith.constant 0 : i32
    %c0_i32_0 = arith.constant 0 : i32
    return %arg0, %c0_i32 : i32, i32
  }
  func.func @transform_2(%arg0: i32) -> (i32, i32) {
    %c0_i32 = arith.constant 0 : i32
    %c0_i32_0 = arith.constant 0 : i32
    return %arg0, %c0_i32 : i32, i32
  }
  func.func @transform_3(%arg0: i32) -> (i32, i32) {
    %c0_i32 = arith.constant 0 : i32
    %c0_i32_0 = arith.constant 0 : i32
    %c0_i32_1 = arith.constant 0 : i32
    return %c0_i32, %c0_i32_0 : i32, i32
  }
  func.func @transform_4(%arg0: i32) -> (i32, i32) {
    %c0_i32 = arith.constant 0 : i32
    %c0_i32_0 = arith.constant 0 : i32
    %c0_i32_1 = arith.constant 0 : i32
    return %c0_i32, %c0_i32_0 : i32, i32
  }
  func.func @transform_5(%arg0: i32) -> (i32, i32) {
    %c0_i32 = arith.constant 0 : i32
    %c0_i32_0 = arith.constant 0 : i32
    %c0_i32_1 = arith.constant 0 : i32
    return %c0_i32, %c0_i32_0 : i32, i32
  }
  func.func @transform_6(%arg0: i32) -> (i32, i32) {
    %c0_i32 = arith.constant 0 : i32
    %c0_i32_0 = arith.constant 0 : i32
    %c0_i32_1 = arith.constant 0 : i32
    return %c0_i32, %c0_i32_0 : i32, i32
  }
  func.func @transform_7(%arg0: i32) -> (i32, i32) {
    %c0_i32 = arith.constant 0 : i32
    %c0_i32_0 = arith.constant 0 : i32
    %c0_i32_1 = arith.constant 0 : i32
    return %c0_i32, %c0_i32_0 : i32, i32
  }
  func.func @transform_8(%arg0: i32) -> (i32, i32) {
    %c0_i32 = arith.constant 0 : i32
    %c0_i32_0 = arith.constant 0 : i32
    %c0_i32_1 = arith.constant 0 : i32
    return %c0_i32, %c0_i32_0 : i32, i32
  }
  func.func @transform_9(%arg0: i32) -> (i32, i32) {
    %c0_i32 = arith.constant 0 : i32
    %c0_i32_0 = arith.constant 0 : i32
    %c0_i32_1 = arith.constant 0 : i32
    return %c0_i32, %c0_i32_0 : i32, i32
  }
  func.func @transform_10(%arg0: i32) -> (i32, i32) {
    %c0_i32 = arith.constant 0 : i32
    %c0_i32_0 = arith.constant 0 : i32
    %c0_i32_1 = arith.constant 0 : i32
    return %c0_i32, %c0_i32_0 : i32, i32
  }
  func.func @transform_11(%arg0: i32) -> (i32, i32) {
    %c0_i32 = arith.constant 0 : i32
    %c0_i32_0 = arith.constant 0 : i32
    %c0_i32_1 = arith.constant 0 : i32
    return %c0_i32, %c0_i32_0 : i32, i32
  }
  func.func @transform_12(%arg0: i32) -> (i32, i32) {
    %c0_i32 = arith.constant 0 : i32
    %c0_i32_0 = arith.constant 0 : i32
    %c0_i32_1 = arith.constant 0 : i32
    return %c0_i32, %c0_i32_0 : i32, i32
  }
  func.func @transform_13(%arg0: i32) -> (i32, i32) {
    %c0_i32 = arith.constant 0 : i32
    %c0_i32_0 = arith.constant 0 : i32
    %c0_i32_1 = arith.constant 0 : i32
    return %c0_i32, %c0_i32_0 : i32, i32
  }
  func.func @transform_14(%arg0: i32) -> (i32, i32) {
    %c0_i32 = arith.constant 0 : i32
    %c0_i32_0 = arith.constant 0 : i32
    %c0_i32_1 = arith.constant 0 : i32
    return %c0_i32, %c0_i32_0 : i32, i32
  }
  func.func @transform_15(%arg0: i32) -> (i32, i32) {
    %c0_i32 = arith.constant 0 : i32
    %c0_i32_0 = arith.constant 0 : i32
    %c0_i32_1 = arith.constant 0 : i32
    return %c0_i32, %c0_i32_0 : i32, i32
  }
  func.func @transform_16(%arg0: i32) -> (i32, i32) {
    %c0_i32 = arith.constant 0 : i32
    %c0_i32_0 = arith.constant 0 : i32
    %c0_i32_1 = arith.constant 0 : i32
    return %c0_i32, %c0_i32_0 : i32, i32
  }
  func.func @transform_17(%arg0: i32) -> (i32, i32) {
    %c0_i32 = arith.constant 0 : i32
    %c0_i32_0 = arith.constant 0 : i32
    %c0_i32_1 = arith.constant 0 : i32
    return %c0_i32, %c0_i32_0 : i32, i32
  }
  func.func @transform_18(%arg0: i32) -> (i32, i32) {
    %c0_i32 = arith.constant 0 : i32
    %c0_i32_0 = arith.constant 0 : i32
    %c0_i32_1 = arith.constant 0 : i32
    return %c0_i32, %c0_i32_0 : i32, i32
  }
  func.func @transform_19(%arg0: i32) -> (i32, i32) {
    %c0_i32 = arith.constant 0 : i32
    %c0_i32_0 = arith.constant 0 : i32
    return %arg0, %c0_i32 : i32, i32
  }
  func.func @transform_20(%arg0: i32) -> (i32, i32) {
    %c0_i32 = arith.constant 0 : i32
    %c0_i32_0 = arith.constant 0 : i32
    return %arg0, %c0_i32 : i32, i32
  }
  func.func @transform_21(%arg0: i32) -> (i32, i32) {
    %c0_i32 = arith.constant 0 : i32
    %c0_i32_0 = arith.constant 0 : i32
    return %arg0, %c0_i32 : i32, i32
  }
}

</mosaic_0001>

<llo_original>
// kernel: tpu_custom_call.1
$region0: #{tpu_custom_call.1}
  #allocation0 [shape = 'u32[]', space=smem, size = 0x4, offset = 0x4, fixed_abs, tag = 'smem constant byte address 0x4 - core index']
  #allocation1 [shape = 'u32[144,128]{1,0:T(1,128)}', space=vmem, size = 0x12000, scoped, tag = 'internal scratch']
  %s0 = inlined_call_operand.vmem [shape: f32[2,16], index: 0, kind: input, shape index: {}]
  %s1 = inlined_call_operand.vmem [shape: f32[2,16], index: 1, kind: input, shape index: {}]
  %s2 = inlined_call_operand.vmem [shape: f32[2,8], index: 2, kind: input, shape index: {}]
  %s3 = inlined_call_operand.vmem [shape: f32[16,32], index: 3, kind: input, shape index: {}]
  %s4 = inlined_call_operand.vmem [shape: f32[1,32], index: 4, kind: input, shape index: {}]
  %s5 = inlined_call_operand.vmem [shape: f32[32,8], index: 5, kind: input, shape index: {}]
  %s6 = inlined_call_operand.vmem [shape: f32[1,8], index: 6, kind: input, shape index: {}]
  %s7 = inlined_call_operand.vmem [shape: f32[16,32], index: 7, kind: input, shape index: {}]
  %s8 = inlined_call_operand.vmem [shape: f32[8,32], index: 8, kind: input, shape index: {}]
  %s9 = inlined_call_operand.vmem [shape: f32[1,32], index: 9, kind: input, shape index: {}]
  %s10 = inlined_call_operand.vmem [shape: f32[32,8], index: 10, kind: input, shape index: {}]
  %s11 = inlined_call_operand.vmem [shape: f32[1,8], index: 11, kind: input, shape index: {}]
  %s12 = inlined_call_operand.vmem [shape: f32[32,8], index: 12, kind: input, shape index: {}]
  %s13 = inlined_call_operand.vmem [shape: f32[1,8], index: 13, kind: input, shape index: {}]
  %s14 = inlined_call_operand.vmem [shape: f32[8,32], index: 14, kind: input, shape index: {}]
  %s15 = inlined_call_operand.vmem [shape: f32[8,32], index: 15, kind: input, shape index: {}]
  %s16 = inlined_call_operand.vmem [shape: f32[1,32], index: 16, kind: input, shape index: {}]
  %s17 = inlined_call_operand.vmem [shape: f32[32,16], index: 17, kind: input, shape index: {}]
  %s18 = inlined_call_operand.vmem [shape: f32[1,16], index: 18, kind: input, shape index: {}]
  %s19 = inlined_call_operand.hbm [shape: f32[2,16], index: 19, kind: output, shape index: {0}]
  %s20 = inlined_call_operand.hbm [shape: f32[2,8], index: 20, kind: output, shape index: {1}]
  %s21 = inlined_call_operand.hbm [shape: f32[2,8], index: 21, kind: output, shape index: {2}]
  %22 = xla_tuple %s19, %s20, %s21
  %s23 = sld [smem:[#allocation0]]
  $region102: #{tpu_custom_call.1} parent=0
    _
  %s25 = ssub.s32 1, %s23
  %s26 = scalar_select 0, %s25, %s23
  $region1: #{tpu_custom_call.1} parent=0
    #allocation2 [shape = 'u8[1024]{0}', space=vmem, size = 0x400, scoped, tag = 'output window, operand 0, single buffered']
    #allocation3 [shape = 's32[1]{0}', space=sflag, size = 0x4, scoped, tag = 'scoped memory for tpu_custom_call.1']
    #allocation4 [shape = 'u8[1024]{0}', space=vmem, size = 0x400, scoped, tag = 'output window, operand 1, single buffered']
    #allocation5 [shape = 's32[1]{0}', space=sflag, size = 0x4, scoped, tag = 'scoped memory for tpu_custom_call.1']
    #allocation6 [shape = 'u8[1024]{0}', space=vmem, size = 0x400, scoped, tag = 'output window, operand 2, single buffered']
    %27 = vsyncpa [#allocation3], 0
    %28 = vsyncpa [#allocation5], 0
    // Predicated region
    $region2: #{tpu_custom_call.1} parent=1 // pred_check
      _
    $region3: #{tpu_custom_call.1} parent=1 // pred_check_branch
      %30 = sbr.rel (0) target = $region5
    $region4: #{tpu_custom_call.1} parent=1 // pred_region
      _
    $region5: #{tpu_custom_call.1} parent=1 // pred_fallthru
      _
    // Predicated region
    $region6: #{tpu_custom_call.1} parent=1 // pred_check
      _
    $region7: #{tpu_custom_call.1} parent=1 // pred_check_branch
      %32 = sbr.rel (0) target = $region9
    $region8: #{tpu_custom_call.1} parent=1 // pred_region
      _
    $region9: #{tpu_custom_call.1} parent=1 // pred_fallthru
      _
    // Predicated region
    $region10: #{tpu_custom_call.1} parent=1 // pred_check
      _
    $region11: #{tpu_custom_call.1} parent=1 // pred_check_branch
      %34 = sbr.rel (0) target = $region13
    $region12: #{tpu_custom_call.1} parent=1 // pred_region
      _
    $region13: #{tpu_custom_call.1} parent=1 // pred_fallthru
      _
    // Predicated region
    $region14: #{tpu_custom_call.1} parent=1 // pred_check
      _
    $region15: #{tpu_custom_call.1} parent=1 // pred_check_branch
      %36 = sbr.rel (0) target = $region17
    $region16: #{tpu_custom_call.1} parent=1 // pred_region
      _
    $region17: #{tpu_custom_call.1} parent=1 // pred_fallthru
      _
    // Predicated region
    $region18: #{tpu_custom_call.1} parent=1 // pred_check
      _
    $region19: #{tpu_custom_call.1} parent=1 // pred_check_branch
      %38 = sbr.rel (0) target = $region21
    $region20: #{tpu_custom_call.1} parent=1 // pred_region
      _
    $region21: #{tpu_custom_call.1} parent=1 // pred_fallthru
      _
    // Predicated region
    $region22: #{tpu_custom_call.1} parent=1 // pred_check
      _
    $region23: #{tpu_custom_call.1} parent=1 // pred_check_branch
      %40 = sbr.rel (0) target = $region25
    $region24: #{tpu_custom_call.1} parent=1 // pred_region
      _
    $region25: #{tpu_custom_call.1} parent=1 // pred_fallthru
      _
    // Predicated region
    $region26: #{tpu_custom_call.1} parent=1 // pred_check
      _
    $region27: #{tpu_custom_call.1} parent=1 // pred_check_branch
      %42 = sbr.rel (0) target = $region29
    $region28: #{tpu_custom_call.1} parent=1 // pred_region
      _
    $region29: #{tpu_custom_call.1} parent=1 // pred_fallthru
      _
    // Predicated region
    $region30: #{tpu_custom_call.1} parent=1 // pred_check
      _
    $region31: #{tpu_custom_call.1} parent=1 // pred_check_branch
      %44 = sbr.rel (0) target = $region33
    $region32: #{tpu_custom_call.1} parent=1 // pred_region
      _
    $region33: #{tpu_custom_call.1} parent=1 // pred_fallthru
      _
    // Predicated region
    $region34: #{tpu_custom_call.1} parent=1 // pred_check
      _
    $region35: #{tpu_custom_call.1} parent=1 // pred_check_branch
      %46 = sbr.rel (0) target = $region37
    $region36: #{tpu_custom_call.1} parent=1 // pred_region
      _
    $region37: #{tpu_custom_call.1} parent=1 // pred_fallthru
      _
    // Predicated region
    $region38: #{tpu_custom_call.1} parent=1 // pred_check
      _
    $region39: #{tpu_custom_call.1} parent=1 // pred_check_branch
      %48 = sbr.rel (0) target = $region41
    $region40: #{tpu_custom_call.1} parent=1 // pred_region
      _
    $region41: #{tpu_custom_call.1} parent=1 // pred_fallthru
      _
    // Predicated region
    $region42: #{tpu_custom_call.1} parent=1 // pred_check
      _
    $region43: #{tpu_custom_call.1} parent=1 // pred_check_branch
      %50 = sbr.rel (0) target = $region45
    $region44: #{tpu_custom_call.1} parent=1 // pred_region
      _
    $region45: #{tpu_custom_call.1} parent=1 // pred_fallthru
      _
    // Predicated region
    $region46: #{tpu_custom_call.1} parent=1 // pred_check
      _
    $region47: #{tpu_custom_call.1} parent=1 // pred_check_branch
      %52 = sbr.rel (0) target = $region49
    $region48: #{tpu_custom_call.1} parent=1 // pred_region
      _
    $region49: #{tpu_custom_call.1} parent=1 // pred_fallthru
      _
    // Predicated region
    $region50: #{tpu_custom_call.1} parent=1 // pred_check
      _
    $region51: #{tpu_custom_call.1} parent=1 // pred_check_branch
      %54 = sbr.rel (0) target = $region53
    $region52: #{tpu_custom_call.1} parent=1 // pred_region
      _
    $region53: #{tpu_custom_call.1} parent=1 // pred_fallthru
      _
    // Predicated region
    $region54: #{tpu_custom_call.1} parent=1 // pred_check
      _
    $region55: #{tpu_custom_call.1} parent=1 // pred_check_branch
      %56 = sbr.rel (0) target = $region57
    $region56: #{tpu_custom_call.1} parent=1 // pred_region
      _
    $region57: #{tpu_custom_call.1} parent=1 // pred_fallthru
      _
    // Predicated region
    $region58: #{tpu_custom_call.1} parent=1 // pred_check
      _
    $region59: #{tpu_custom_call.1} parent=1 // pred_check_branch
      %58 = sbr.rel (0) target = $region61
    $region60: #{tpu_custom_call.1} parent=1 // pred_region
      _
    $region61: #{tpu_custom_call.1} parent=1 // pred_fallthru
      _
    // Predicated region
    $region62: #{tpu_custom_call.1} parent=1 // pred_check
      _
    $region63: #{tpu_custom_call.1} parent=1 // pred_check_branch
      %60 = sbr.rel (0) target = $region65
    $region64: #{tpu_custom_call.1} parent=1 // pred_region
      _
    $region65: #{tpu_custom_call.1} parent=1 // pred_fallthru
      _
    // Predicated region
    $region66: #{tpu_custom_call.1} parent=1 // pred_check
      _
    $region67: #{tpu_custom_call.1} parent=1 // pred_check_branch
      %62 = sbr.rel (0) target = $region69
    $region68: #{tpu_custom_call.1} parent=1 // pred_region
      _
    $region69: #{tpu_custom_call.1} parent=1 // pred_fallthru
      _
    // Predicated region
    $region70: #{tpu_custom_call.1} parent=1 // pred_check
      _
    $region71: #{tpu_custom_call.1} parent=1 // pred_check_branch
      %64 = sbr.rel (0) target = $region73
    $region72: #{tpu_custom_call.1} parent=1 // pred_region
      _
    $region73: #{tpu_custom_call.1} parent=1 // pred_fallthru
      _
    // Predicated region
    $region74: #{tpu_custom_call.1} parent=1 // pred_check
      _
    $region75: #{tpu_custom_call.1} parent=1 // pred_check_branch
      %66 = sbr.rel (0) target = $region77
    $region76: #{tpu_custom_call.1} parent=1 // pred_region
      _
    $region77: #{tpu_custom_call.1} parent=1 // pred_fallthru
      _
    %v67 = vld [vmem:[%s1] sm:$0x3]
    %v68 = vld [vmem:[%s3] sm:$0xff]
    %v69 = vld [vmem:[%s3 + $0x8] sm:$0xff]
    %v70 = vld [vmem:[%s4] sm:$0x1]
    %v72 = vlaneseq
    %v73 = vshrl.u32 %v72, 7
    %v74 = vsub.s32 0, %v73
    %v75 = vrot.slane %v70, %v74
    %vm77 = vcmask 130048
    %v79 = vsel %vm77, %v67, 0
    %81 = vmatprep.subr.mxu0 0.0
    %82 = vmatpush1.msra.mxu0 %v68
    %83 = vmatprep.subr.mxu0 0.0
    %84 = vmatpush1.msra.mxu0 %v69
    %85 = vmatprep.subr.mxu0 0.0
    %86 = vmatpush1.msra.mxu0 0.0
    %87 = vmatprep.subr.mxu0 0.0
    %88 = vmatpush1.msra.mxu0 0.0
    %89 = vmatprep.subr.mxu0 0.0
    %90 = vmatpush1.msra.mxu0 0.0
    %91 = vmatprep.subr.mxu0 0.0
    %92 = vmatpush1.msra.mxu0 0.0
    %93 = vmatprep.subr.mxu0 0.0
    %94 = vmatpush1.msra.mxu0 0.0
    %95 = vmatprep.subr.mxu0 0.0
    %96 = vmatpush1.msra.mxu0 0.0
    %97 = vmatprep.subr.mxu0 0.0
    %98 = vmatpush1.msra.mxu0 0.0
    %99 = vmatprep.subr.mxu0 0.0
    %100 = vmatpush1.msra.mxu0 0.0
    %101 = vmatprep.subr.mxu0 0.0
    %102 = vmatpush1.msra.mxu0 0.0
    %103 = vmatprep.subr.mxu0 0.0
    %104 = vmatpush1.msra.mxu0 0.0
    %105 = vmatprep.subr.mxu0 0.0
    %106 = vmatpush1.msra.mxu0 0.0
    %107 = vmatprep.subr.mxu0 0.0
    %108 = vmatpush1.msra.mxu0 0.0
    %109 = vmatprep.subr.mxu0 0.0
    %110 = vmatpush1.msra.mxu0 0.0
    %111 = vmatprep.subr.mxu0 0.0
    %112 = vmatpush1.msra.mxu0 0.0
    %113 = vmatprep.subr.mxu0 0.0
    %114 = vmatpush1.msra.mxu0 0.0
    %115 = vmatprep.subr.mxu0 0.0
    %116 = vmatpush1.msra.mxu0 0.0
    %117 = vmatprep.subr.mxu0 0.0
    %118 = vmatpush1.msra.mxu0 0.0
    %119 = vmatprep.subr.mxu0 0.0
    %120 = vmatpush1.msra.mxu0 0.0
    %121 = vmatprep.subr.mxu0 0.0
    %122 = vmatpush1.msra.mxu0 0.0
    %123 = vmatprep.subr.mxu0 0.0
    %124 = vmatpush1.msra.mxu0 0.0
    %125 = vmatprep.subr.mxu0 0.0
    %126 = vmatpush1.msra.mxu0 0.0
    %127 = vmatprep.subr.mxu0 0.0
    %128 = vmatpush1.msra.mxu0 0.0
    %129 = vmatprep.subr.mxu0 0.0
    %130 = vmatpush1.msra.mxu0 0.0
    %131 = vmatprep.subr.mxu0 0.0
    %132 = vmatpush1.msra.mxu0 0.0
    %133 = vmatprep.subr.mxu0 0.0
    %134 = vmatpush1.msra.mxu0 0.0
    %135 = vmatprep.subr.mxu0 0.0
    %136 = vmatpush1.msra.mxu0 0.0
    %137 = vmatprep.subr.mxu0 0.0
    %138 = vmatpush1.msra.mxu0 0.0
    %139 = vmatprep.subr.mxu0 0.0
    %140 = vmatpush1.msra.mxu0 0.0
    %141 = vmatprep.subr.mxu0 0.0
    %142 = vmatpush1.msra.mxu0 0.0
    %143 = vmatprep.subr.mxu0 0.0
    %144 = vmatpush1.msra.mxu0 0.0
    %145 = vmatprep.mubr.f32.mxu0 0.0
    %146 = vmatmul.mubr.f32.gmra.mrb[0].mxu0 %v79
    %v147 = vpop.f32.mrb[0].mxu0
    %v148 = vadd.f32 %v75, %v147
    %v149 = vpop.f32.mrb[0].mxu0
    %150 = vdwg.mxu0
    %v151 = vmax.f32 %v148, 0.0
    %v152 = vld [vmem:[%s5] sm:$0xff]
    %v153 = vld [vmem:[%s5 + $0x8] sm:$0xff]
    %v154 = vld [vmem:[%s5 + $0x10] sm:$0xff]
    %v155 = vld [vmem:[%s5 + $0x18] sm:$0xff]
    %v156 = vld [vmem:[%s6] sm:$0x1]
    %v158 = vlaneseq
    %v159 = vshrl.u32 %v158, 7
    %v160 = vsub.s32 0, %v159
    %v161 = vrot.slane %v156, %v160
    %vm163 = vcmask 261120
    %v165 = vsel %vm163, %v151, 0
    %167 = vmatprep.subr.mxu0 0.0
    %168 = vmatpush1.msra.mxu0 %v152
    %169 = vmatprep.subr.mxu0 0.0
    %170 = vmatpush1.msra.mxu0 %v153
    %171 = vmatprep.subr.mxu0 0.0
    %172 = vmatpush1.msra.mxu0 %v154
    %173 = vmatprep.subr.mxu0 0.0
    %174 = vmatpush1.msra.mxu0 %v155
    %175 = vmatprep.subr.mxu0 0.0
    %176 = vmatpush1.msra.mxu0 0.0
    %177 = vmatprep.subr.mxu0 0.0
    %178 = vmatpush1.msra.mxu0 0.0
    %179 = vmatprep.subr.mxu0 0.0
    %180 = vmatpush1.msra.mxu0 0.0
    %181 = vmatprep.subr.mxu0 0.0
    %182 = vmatpush1.msra.mxu0 0.0
    %183 = vmatprep.subr.mxu0 0.0
    %184 = vmatpush1.msra.mxu0 0.0
    %185 = vmatprep.subr.mxu0 0.0
    %186 = vmatpush1.msra.mxu0 0.0
    %187 = vmatprep.subr.mxu0 0.0
    %188 = vmatpush1.msra.mxu0 0.0
    %189 = vmatprep.subr.mxu0 0.0
    %190 = vmatpush1.msra.mxu0 0.0
    %191 = vmatprep.subr.mxu0 0.0
    %192 = vmatpush1.msra.mxu0 0.0
    %193 = vmatprep.subr.mxu0 0.0
    %194 = vmatpush1.msra.mxu0 0.0
    %195 = vmatprep.subr.mxu0 0.0
    %196 = vmatpush1.msra.mxu0 0.0
    %197 = vmatprep.subr.mxu0 0.0
    %198 = vmatpush1.msra.mxu0 0.0
    %199 = vmatprep.subr.mxu0 0.0
    %200 = vmatpush1.msra.mxu0 0.0
    %201 = vmatprep.subr.mxu0 0.0
    %202 = vmatpush1.msra.mxu0 0.0
    %203 = vmatprep.subr.mxu0 0.0
    %204 = vmatpush1.msra.mxu0 0.0
    %205 = vmatprep.subr.mxu0 0.0
    %206 = vmatpush1.msra.mxu0 0.0
    %207 = vmatprep.subr.mxu0 0.0
    %208 = vmatpush1.msra.mxu0 0.0
    %209 = vmatprep.subr.mxu0 0.0
    %210 = vmatpush1.msra.mxu0 0.0
    %211 = vmatprep.subr.mxu0 0.0
    %212 = vmatpush1.msra.mxu0 0.0
    %213 = vmatprep.subr.mxu0 0.0
    %214 = vmatpush1.msra.mxu0 0.0
    %215 = vmatprep.subr.mxu0 0.0
    %216 = vmatpush1.msra.mxu0 0.0
    %217 = vmatprep.subr.mxu0 0.0
    %218 = vmatpush1.msra.mxu0 0.0
    %219 = vmatprep.subr.mxu0 0.0
    %220 = vmatpush1.msra.mxu0 0.0
    %221 = vmatprep.subr.mxu0 0.0
    %222 = vmatpush1.msra.mxu0 0.0
    %223 = vmatprep.subr.mxu0 0.0
    %224 = vmatpush1.msra.mxu0 0.0
    %225 = vmatprep.subr.mxu0 0.0
    %226 = vmatpush1.msra.mxu0 0.0
    %227 = vmatprep.subr.mxu0 0.0
    %228 = vmatpush1.msra.mxu0 0.0
    %229 = vmatprep.subr.mxu0 0.0
    %230 = vmatpush1.msra.mxu0 0.0
    %231 = vmatprep.mubr.f32.mxu0 0.0
    %232 = vmatmul.mubr.f32.gmra.mrb[0].mxu0 %v165
    %v233 = vpop.f32.mrb[0].mxu0
    %v234 = vadd.f32 %v161, %v233
    %v235 = vpop.f32.mrb[0].mxu0
    %236 = vdwg.mxu0
    %v237 = vmax.f32 %v234, 0.0
    %v238 = vld [vmem:[%s0] sm:$0x3]
    %v239 = vld [vmem:[%s7] sm:$0xff]
    %v240 = vld [vmem:[%s7 + $0x8] sm:$0xff]
    %v241 = vld [vmem:[%s8] sm:$0xff]
    %vm242 = vcmask 64512
    %v244 = vsel %vm242, %v237, 0
    %246 = vmatprep.subr.mxu0 0.0
    %247 = vmatpush1.msra.mxu0 %v241
    %248 = vmatprep.subr.mxu0 0.0
    %249 = vmatpush1.msra.mxu0 0.0
    %250 = vmatprep.subr.mxu0 0.0
    %251 = vmatpush1.msra.mxu0 0.0
    %252 = vmatprep.subr.mxu0 0.0
    %253 = vmatpush1.msra.mxu0 0.0
    %254 = vmatprep.subr.mxu0 0.0
    %255 = vmatpush1.msra.mxu0 0.0
    %256 = vmatprep.subr.mxu0 0.0
    %257 = vmatpush1.msra.mxu0 0.0
    %258 = vmatprep.subr.mxu0 0.0
    %259 = vmatpush1.msra.mxu0 0.0
    %260 = vmatprep.subr.mxu0 0.0
    %261 = vmatpush1.msra.mxu0 0.0
    %262 = vmatprep.subr.mxu0 0.0
    %263 = vmatpush1.msra.mxu0 0.0
    %264 = vmatprep.subr.mxu0 0.0
    %265 = vmatpush1.msra.mxu0 0.0
    %266 = vmatprep.subr.mxu0 0.0
    %267 = vmatpush1.msra.mxu0 0.0
    %268 = vmatprep.subr.mxu0 0.0
    %269 = vmatpush1.msra.mxu0 0.0
    %270 = vmatprep.subr.mxu0 0.0
    %271 = vmatpush1.msra.mxu0 0.0
    %272 = vmatprep.subr.mxu0 0.0
    %273 = vmatpush1.msra.mxu0 0.0
    %274 = vmatprep.subr.mxu0 0.0
    %275 = vmatpush1.msra.mxu0 0.0
    %276 = vmatprep.subr.mxu0 0.0
    %277 = vmatpush1.msra.mxu0 0.0
    %278 = vmatprep.subr.mxu0 0.0
    %279 = vmatpush1.msra.mxu0 0.0
    %280 = vmatprep.subr.mxu0 0.0
    %281 = vmatpush1.msra.mxu0 0.0
    %282 = vmatprep.subr.mxu0 0.0
    %283 = vmatpush1.msra.mxu0 0.0
    %284 = vmatprep.subr.mxu0 0.0
    %285 = vmatpush1.msra.mxu0 0.0
    %286 = vmatprep.subr.mxu0 0.0
    %287 = vmatpush1.msra.mxu0 0.0
    %288 = vmatprep.subr.mxu0 0.0
    %289 = vmatpush1.msra.mxu0 0.0
    %290 = vmatprep.subr.mxu0 0.0
    %291 = vmatpush1.msra.mxu0 0.0
    %292 = vmatprep.subr.mxu0 0.0
    %293 = vmatpush1.msra.mxu0 0.0
    %294 = vmatprep.subr.mxu0 0.0
    %295 = vmatpush1.msra.mxu0 0.0
    %296 = vmatprep.subr.mxu0 0.0
    %297 = vmatpush1.msra.mxu0 0.0
    %298 = vmatprep.subr.mxu0 0.0
    %299 = vmatpush1.msra.mxu0 0.0
    %300 = vmatprep.subr.mxu0 0.0
    %301 = vmatpush1.msra.mxu0 0.0
    %302 = vmatprep.subr.mxu0 0.0
    %303 = vmatpush1.msra.mxu0 0.0
    %304 = vmatprep.subr.mxu0 0.0
    %305 = vmatpush1.msra.mxu0 0.0
    %306 = vmatprep.subr.mxu0 0.0
    %307 = vmatpush1.msra.mxu0 0.0
    %308 = vmatprep.subr.mxu0 0.0
    %309 = vmatpush1.msra.mxu0 0.0
    %310 = vmatprep.mubr.f32.mxu0 0.0
    %311 = vmatmul.mubr.f32.gmra.mrb[0].mxu0 %v244
    %v312 = vpop.f32.mrb[0].mxu0
    %v313 = vadd.f32 0.0, %v312
    %v314 = vpop.f32.mrb[0].mxu0
    %315 = vdwg.mxu0
    %v317 = vsel %vm77, %v238, 0
    %319 = vmatprep.subr.mxu0 0.0
    %320 = vmatpush1.msra.mxu0 %v239
    %321 = vmatprep.subr.mxu0 0.0
    %322 = vmatpush1.msra.mxu0 %v240
    %323 = vmatprep.subr.mxu0 0.0
    %324 = vmatpush1.msra.mxu0 0.0
    %325 = vmatprep.subr.mxu0 0.0
    %326 = vmatpush1.msra.mxu0 0.0
    %327 = vmatprep.subr.mxu0 0.0
    %328 = vmatpush1.msra.mxu0 0.0
    %329 = vmatprep.subr.mxu0 0.0
    %330 = vmatpush1.msra.mxu0 0.0
    %331 = vmatprep.subr.mxu0 0.0
    %332 = vmatpush1.msra.mxu0 0.0
    %333 = vmatprep.subr.mxu0 0.0
    %334 = vmatpush1.msra.mxu0 0.0
    %335 = vmatprep.subr.mxu0 0.0
    %336 = vmatpush1.msra.mxu0 0.0
    %337 = vmatprep.subr.mxu0 0.0
    %338 = vmatpush1.msra.mxu0 0.0
    %339 = vmatprep.subr.mxu0 0.0
    %340 = vmatpush1.msra.mxu0 0.0
    %341 = vmatprep.subr.mxu0 0.0
    %342 = vmatpush1.msra.mxu0 0.0
    %343 = vmatprep.subr.mxu0 0.0
    %344 = vmatpush1.msra.mxu0 0.0
    %345 = vmatprep.subr.mxu0 0.0
    %346 = vmatpush1.msra.mxu0 0.0
    %347 = vmatprep.subr.mxu0 0.0
    %348 = vmatpush1.msra.mxu0 0.0
    %349 = vmatprep.subr.mxu0 0.0
    %350 = vmatpush1.msra.mxu0 0.0
    %351 = vmatprep.subr.mxu0 0.0
    %352 = vmatpush1.msra.mxu0 0.0
    %353 = vmatprep.subr.mxu0 0.0
    %354 = vmatpush1.msra.mxu0 0.0
    %355 = vmatprep.subr.mxu0 0.0
    %356 = vmatpush1.msra.mxu0 0.0
    %357 = vmatprep.subr.mxu0 0.0
    %358 = vmatpush1.msra.mxu0 0.0
    %359 = vmatprep.subr.mxu0 0.0
    %360 = vmatpush1.msra.mxu0 0.0
    %361 = vmatprep.subr.mxu0 0.0
    %362 = vmatpush1.msra.mxu0 0.0
    %363 = vmatprep.subr.mxu0 0.0
    %364 = vmatpush1.msra.mxu0 0.0
    %365 = vmatprep.subr.mxu0 0.0
    %366 = vmatpush1.msra.mxu0 0.0
    %367 = vmatprep.subr.mxu0 0.0
    %368 = vmatpush1.msra.mxu0 0.0
    %369 = vmatprep.subr.mxu0 0.0
    %370 = vmatpush1.msra.mxu0 0.0
    %371 = vmatprep.subr.mxu0 0.0
    %372 = vmatpush1.msra.mxu0 0.0
    %373 = vmatprep.subr.mxu0 0.0
    %374 = vmatpush1.msra.mxu0 0.0
    %375 = vmatprep.subr.mxu0 0.0
    %376 = vmatpush1.msra.mxu0 0.0
    %377 = vmatprep.subr.mxu0 0.0
    %378 = vmatpush1.msra.mxu0 0.0
    %379 = vmatprep.subr.mxu0 0.0
    %380 = vmatpush1.msra.mxu0 0.0
    %381 = vmatprep.subr.mxu0 0.0
    %382 = vmatpush1.msra.mxu0 0.0
    %383 = vmatprep.mubr.f32.mxu0 0.0
    %384 = vmatmul.mubr.f32.gmra.mrb[0].mxu0 %v317
    %v385 = vpop.f32.mrb[0].mxu0
    %v386 = vadd.f32 %v313, %v385
    %v387 = vpop.f32.mrb[0].mxu0
    %388 = vdwg.mxu0
    %v389 = vld [vmem:[%s9] sm:$0x1]
    %v391 = vlaneseq
    %v392 = vshrl.u32 %v391, 7
    %v393 = vsub.s32 0, %v392
    %v394 = vrot.slane %v389, %v393
    %v396 = vadd.f32 %v386, %v394
    %v397 = vmax.f32 %v396, 0.0
    %v398 = vld [vmem:[%s10] sm:$0xff]
    %v399 = vld [vmem:[%s10 + $0x8] sm:$0xff]
    %v400 = vld [vmem:[%s10 + $0x10] sm:$0xff]
    %v401 = vld [vmem:[%s10 + $0x18] sm:$0xff]
    %v402 = vld [vmem:[%s11] sm:$0x1]
    %v404 = vlaneseq
    %v405 = vshrl.u32 %v404, 7
    %v406 = vsub.s32 0, %v405
    %v407 = vrot.slane %v402, %v406
    %v410 = vsel %vm163, %v397, 0
    %412 = vmatprep.subr.mxu0 0.0
    %413 = vmatpush1.msra.mxu0 %v398
    %414 = vmatprep.subr.mxu0 0.0
    %415 = vmatpush1.msra.mxu0 %v399
    %416 = vmatprep.subr.mxu0 0.0
    %417 = vmatpush1.msra.mxu0 %v400
    %418 = vmatprep.subr.mxu0 0.0
    %419 = vmatpush1.msra.mxu0 %v401
    %420 = vmatprep.subr.mxu0 0.0
    %421 = vmatpush1.msra.mxu0 0.0
    %422 = vmatprep.subr.mxu0 0.0
    %423 = vmatpush1.msra.mxu0 0.0
    %424 = vmatprep.subr.mxu0 0.0
    %425 = vmatpush1.msra.mxu0 0.0
    %426 = vmatprep.subr.mxu0 0.0
    %427 = vmatpush1.msra.mxu0 0.0
    %428 = vmatprep.subr.mxu0 0.0
    %429 = vmatpush1.msra.mxu0 0.0
    %430 = vmatprep.subr.mxu0 0.0
    %431 = vmatpush1.msra.mxu0 0.0
    %432 = vmatprep.subr.mxu0 0.0
    %433 = vmatpush1.msra.mxu0 0.0
    %434 = vmatprep.subr.mxu0 0.0
    %435 = vmatpush1.msra.mxu0 0.0
    %436 = vmatprep.subr.mxu0 0.0
    %437 = vmatpush1.msra.mxu0 0.0
    %438 = vmatprep.subr.mxu0 0.0
    %439 = vmatpush1.msra.mxu0 0.0
    %440 = vmatprep.subr.mxu0 0.0
    %441 = vmatpush1.msra.mxu0 0.0
    %442 = vmatprep.subr.mxu0 0.0
    %443 = vmatpush1.msra.mxu0 0.0
    %444 = vmatprep.subr.mxu0 0.0
    %445 = vmatpush1.msra.mxu0 0.0
    %446 = vmatprep.subr.mxu0 0.0
    %447 = vmatpush1.msra.mxu0 0.0
    %448 = vmatprep.subr.mxu0 0.0
    %449 = vmatpush1.msra.mxu0 0.0
    %450 = vmatprep.subr.mxu0 0.0
    %451 = vmatpush1.msra.mxu0 0.0
    %452 = vmatprep.subr.mxu0 0.0
    %453 = vmatpush1.msra.mxu0 0.0
    %454 = vmatprep.subr.mxu0 0.0
    %455 = vmatpush1.msra.mxu0 0.0
    %456 = vmatprep.subr.mxu0 0.0
    %457 = vmatpush1.msra.mxu0 0.0
    %458 = vmatprep.subr.mxu0 0.0
    %459 = vmatpush1.msra.mxu0 0.0
    %460 = vmatprep.subr.mxu0 0.0
    %461 = vmatpush1.msra.mxu0 0.0
    %462 = vmatprep.subr.mxu0 0.0
    %463 = vmatpush1.msra.mxu0 0.0
    %464 = vmatprep.subr.mxu0 0.0
    %465 = vmatpush1.msra.mxu0 0.0
    %466 = vmatprep.subr.mxu0 0.0
    %467 = vmatpush1.msra.mxu0 0.0
    %468 = vmatprep.subr.mxu0 0.0
    %469 = vmatpush1.msra.mxu0 0.0
    %470 = vmatprep.subr.mxu0 0.0
    %471 = vmatpush1.msra.mxu0 0.0
    %472 = vmatprep.subr.mxu0 0.0
    %473 = vmatpush1.msra.mxu0 0.0
    %474 = vmatprep.subr.mxu0 0.0
    %475 = vmatpush1.msra.mxu0 0.0
    %476 = vmatprep.mubr.f32.mxu0 0.0
    %477 = vmatmul.mubr.f32.gmra.mrb[0].mxu0 %v410
    %v478 = vpop.f32.mrb[0].mxu0
    %v479 = vadd.f32 %v407, %v478
    %v480 = vpop.f32.mrb[0].mxu0
    %481 = vdwg.mxu0
    %v482 = vld [vmem:[%s12] sm:$0xff]
    %v483 = vld [vmem:[%s12 + $0x8] sm:$0xff]
    %v484 = vld [vmem:[%s12 + $0x10] sm:$0xff]
    %v485 = vld [vmem:[%s12 + $0x18] sm:$0xff]
    %v486 = vld [vmem:[%s13] sm:$0x1]
    %v488 = vlaneseq
    %v489 = vshrl.u32 %v488, 7
    %v490 = vsub.s32 0, %v489
    %v491 = vrot.slane %v486, %v490
    %493 = vmatprep.subr.mxu0 0.0
    %494 = vmatpush1.msra.mxu0 %v482
    %495 = vmatprep.subr.mxu0 0.0
    %496 = vmatpush1.msra.mxu0 %v483
    %497 = vmatprep.subr.mxu0 0.0
    %498 = vmatpush1.msra.mxu0 %v484
    %499 = vmatprep.subr.mxu0 0.0
    %500 = vmatpush1.msra.mxu0 %v485
    %501 = vmatprep.subr.mxu0 0.0
    %502 = vmatpush1.msra.mxu0 0.0
    %503 = vmatprep.subr.mxu0 0.0
    %504 = vmatpush1.msra.mxu0 0.0
    %505 = vmatprep.subr.mxu0 0.0
    %506 = vmatpush1.msra.mxu0 0.0
    %507 = vmatprep.subr.mxu0 0.0
    %508 = vmatpush1.msra.mxu0 0.0
    %509 = vmatprep.subr.mxu0 0.0
    %510 = vmatpush1.msra.mxu0 0.0
    %511 = vmatprep.subr.mxu0 0.0
    %512 = vmatpush1.msra.mxu0 0.0
    %513 = vmatprep.subr.mxu0 0.0
    %514 = vmatpush1.msra.mxu0 0.0
    %515 = vmatprep.subr.mxu0 0.0
    %516 = vmatpush1.msra.mxu0 0.0
    %517 = vmatprep.subr.mxu0 0.0
    %518 = vmatpush1.msra.mxu0 0.0
    %519 = vmatprep.subr.mxu0 0.0
    %520 = vmatpush1.msra.mxu0 0.0
    %521 = vmatprep.subr.mxu0 0.0
    %522 = vmatpush1.msra.mxu0 0.0
    %523 = vmatprep.subr.mxu0 0.0
    %524 = vmatpush1.msra.mxu0 0.0
    %525 = vmatprep.subr.mxu0 0.0
    %526 = vmatpush1.msra.mxu0 0.0
    %527 = vmatprep.subr.mxu0 0.0
    %528 = vmatpush1.msra.mxu0 0.0
    %529 = vmatprep.subr.mxu0 0.0
    %530 = vmatpush1.msra.mxu0 0.0
    %531 = vmatprep.subr.mxu0 0.0
    %532 = vmatpush1.msra.mxu0 0.0
    %533 = vmatprep.subr.mxu0 0.0
    %534 = vmatpush1.msra.mxu0 0.0
    %535 = vmatprep.subr.mxu0 0.0
    %536 = vmatpush1.msra.mxu0 0.0
    %537 = vmatprep.subr.mxu0 0.0
    %538 = vmatpush1.msra.mxu0 0.0
    %539 = vmatprep.subr.mxu0 0.0
    %540 = vmatpush1.msra.mxu0 0.0
    %541 = vmatprep.subr.mxu0 0.0
    %542 = vmatpush1.msra.mxu0 0.0
    %543 = vmatprep.subr.mxu0 0.0
    %544 = vmatpush1.msra.mxu0 0.0
    %545 = vmatprep.subr.mxu0 0.0
    %546 = vmatpush1.msra.mxu0 0.0
    %547 = vmatprep.subr.mxu0 0.0
    %548 = vmatpush1.msra.mxu0 0.0
    %549 = vmatprep.subr.mxu0 0.0
    %550 = vmatpush1.msra.mxu0 0.0
    %551 = vmatprep.subr.mxu0 0.0
    %552 = vmatpush1.msra.mxu0 0.0
    %553 = vmatprep.subr.mxu0 0.0
    %554 = vmatpush1.msra.mxu0 0.0
    %555 = vmatprep.subr.mxu0 0.0
    %556 = vmatpush1.msra.mxu0 0.0
    %557 = vmatprep.mubr.f32.mxu0 0.0
    %558 = vmatmul.mubr.f32.gmra.mrb[0].mxu0 %v410
    %v559 = vpop.f32.mrb[0].mxu0
    %v560 = vadd.f32 %v491, %v559
    %v561 = vpop.f32.mrb[0].mxu0
    %562 = vdwg.mxu0
    %v563 = vmul.f32 %v560, 1.442695
    %v564 = vpow.pop %v563
    %v565 = vld [vmem:[%s2] sm:$0x3]
    %v566 = vmul.f32 %v564, %v565
    %v567 = vadd.f32 %v479, %v566
    %v568 = vld [vmem:[%s14] sm:$0xff]
    %v569 = vld [vmem:[%s15] sm:$0xff]
    %570 = vmatprep.subr.mxu0 0.0
    %571 = vmatpush1.msra.mxu0 %v569
    %572 = vmatprep.subr.mxu0 0.0
    %573 = vmatpush1.msra.mxu0 0.0
    %574 = vmatprep.subr.mxu0 0.0
    %575 = vmatpush1.msra.mxu0 0.0
    %576 = vmatprep.subr.mxu0 0.0
    %577 = vmatpush1.msra.mxu0 0.0
    %578 = vmatprep.subr.mxu0 0.0
    %579 = vmatpush1.msra.mxu0 0.0
    %580 = vmatprep.subr.mxu0 0.0
    %581 = vmatpush1.msra.mxu0 0.0
    %582 = vmatprep.subr.mxu0 0.0
    %583 = vmatpush1.msra.mxu0 0.0
    %584 = vmatprep.subr.mxu0 0.0
    %585 = vmatpush1.msra.mxu0 0.0
    %586 = vmatprep.subr.mxu0 0.0
    %587 = vmatpush1.msra.mxu0 0.0
    %588 = vmatprep.subr.mxu0 0.0
    %589 = vmatpush1.msra.mxu0 0.0
    %590 = vmatprep.subr.mxu0 0.0
    %591 = vmatpush1.msra.mxu0 0.0
    %592 = vmatprep.subr.mxu0 0.0
    %593 = vmatpush1.msra.mxu0 0.0
    %594 = vmatprep.subr.mxu0 0.0
    %595 = vmatpush1.msra.mxu0 0.0
    %596 = vmatprep.subr.mxu0 0.0
    %597 = vmatpush1.msra.mxu0 0.0
    %598 = vmatprep.subr.mxu0 0.0
    %599 = vmatpush1.msra.mxu0 0.0
    %600 = vmatprep.subr.mxu0 0.0
    %601 = vmatpush1.msra.mxu0 0.0
    %602 = vmatprep.subr.mxu0 0.0
    %603 = vmatpush1.msra.mxu0 0.0
    %604 = vmatprep.subr.mxu0 0.0
    %605 = vmatpush1.msra.mxu0 0.0
    %606 = vmatprep.subr.mxu0 0.0
    %607 = vmatpush1.msra.mxu0 0.0
    %608 = vmatprep.subr.mxu0 0.0
    %609 = vmatpush1.msra.mxu0 0.0
    %610 = vmatprep.subr.mxu0 0.0
    %611 = vmatpush1.msra.mxu0 0.0
    %612 = vmatprep.subr.mxu0 0.0
    %613 = vmatpush1.msra.mxu0 0.0
    %614 = vmatprep.subr.mxu0 0.0
    %615 = vmatpush1.msra.mxu0 0.0
    %616 = vmatprep.subr.mxu0 0.0
    %617 = vmatpush1.msra.mxu0 0.0
    %618 = vmatprep.subr.mxu0 0.0
    %619 = vmatpush1.msra.mxu0 0.0
    %620 = vmatprep.subr.mxu0 0.0
    %621 = vmatpush1.msra.mxu0 0.0
    %622 = vmatprep.subr.mxu0 0.0
    %623 = vmatpush1.msra.mxu0 0.0
    %624 = vmatprep.subr.mxu0 0.0
    %625 = vmatpush1.msra.mxu0 0.0
    %626 = vmatprep.subr.mxu0 0.0
    %627 = vmatpush1.msra.mxu0 0.0
    %628 = vmatprep.subr.mxu0 0.0
    %629 = vmatpush1.msra.mxu0 0.0
    %630 = vmatprep.subr.mxu0 0.0
    %631 = vmatpush1.msra.mxu0 0.0
    %632 = vmatprep.subr.mxu0 0.0
    %633 = vmatpush1.msra.mxu0 0.0
    %634 = vmatprep.mubr.f32.mxu0 0.0
    %635 = vmatmul.mubr.f32.gmra.mrb[0].mxu0 %v244
    %v636 = vpop.f32.mrb[0].mxu0
    %v637 = vadd.f32 0.0, %v636
    %v638 = vpop.f32.mrb[0].mxu0
    %639 = vdwg.mxu0
    %v641 = vsel %vm242, %v567, 0
    %643 = vmatprep.subr.mxu0 0.0
    %644 = vmatpush1.msra.mxu0 %v568
    %645 = vmatprep.subr.mxu0 0.0
    %646 = vmatpush1.msra.mxu0 0.0
    %647 = vmatprep.subr.mxu0 0.0
    %648 = vmatpush1.msra.mxu0 0.0
    %649 = vmatprep.subr.mxu0 0.0
    %650 = vmatpush1.msra.mxu0 0.0
    %651 = vmatprep.subr.mxu0 0.0
    %652 = vmatpush1.msra.mxu0 0.0
    %653 = vmatprep.subr.mxu0 0.0
    %654 = vmatpush1.msra.mxu0 0.0
    %655 = vmatprep.subr.mxu0 0.0
    %656 = vmatpush1.msra.mxu0 0.0
    %657 = vmatprep.subr.mxu0 0.0
    %658 = vmatpush1.msra.mxu0 0.0
    %659 = vmatprep.subr.mxu0 0.0
    %660 = vmatpush1.msra.mxu0 0.0
    %661 = vmatprep.subr.mxu0 0.0
    %662 = vmatpush1.msra.mxu0 0.0
    %663 = vmatprep.subr.mxu0 0.0
    %664 = vmatpush1.msra.mxu0 0.0
    %665 = vmatprep.subr.mxu0 0.0
    %666 = vmatpush1.msra.mxu0 0.0
    %667 = vmatprep.subr.mxu0 0.0
    %668 = vmatpush1.msra.mxu0 0.0
    %669 = vmatprep.subr.mxu0 0.0
    %670 = vmatpush1.msra.mxu0 0.0
    %671 = vmatprep.subr.mxu0 0.0
    %672 = vmatpush1.msra.mxu0 0.0
    %673 = vmatprep.subr.mxu0 0.0
    %674 = vmatpush1.msra.mxu0 0.0
    %675 = vmatprep.subr.mxu0 0.0
    %676 = vmatpush1.msra.mxu0 0.0
    %677 = vmatprep.subr.mxu0 0.0
    %678 = vmatpush1.msra.mxu0 0.0
    %679 = vmatprep.subr.mxu0 0.0
    %680 = vmatpush1.msra.mxu0 0.0
    %681 = vmatprep.subr.mxu0 0.0
    %682 = vmatpush1.msra.mxu0 0.0
    %683 = vmatprep.subr.mxu0 0.0
    %684 = vmatpush1.msra.mxu0 0.0
    %685 = vmatprep.subr.mxu0 0.0
    %686 = vmatpush1.msra.mxu0 0.0
    %687 = vmatprep.subr.mxu0 0.0
    %688 = vmatpush1.msra.mxu0 0.0
    %689 = vmatprep.subr.mxu0 0.0
    %690 = vmatpush1.msra.mxu0 0.0
    %691 = vmatprep.subr.mxu0 0.0
    %692 = vmatpush1.msra.mxu0 0.0
    %693 = vmatprep.subr.mxu0 0.0
    %694 = vmatpush1.msra.mxu0 0.0
    %695 = vmatprep.subr.mxu0 0.0
    %696 = vmatpush1.msra.mxu0 0.0
    %697 = vmatprep.subr.mxu0 0.0
    %698 = vmatpush1.msra.mxu0 0.0
    %699 = vmatprep.subr.mxu0 0.0
    %700 = vmatpush1.msra.mxu0 0.0
    %701 = vmatprep.subr.mxu0 0.0
    %702 = vmatpush1.msra.mxu0 0.0
    %703 = vmatprep.subr.mxu0 0.0
    %704 = vmatpush1.msra.mxu0 0.0
    %705 = vmatprep.subr.mxu0 0.0
    %706 = vmatpush1.msra.mxu0 0.0
    %707 = vmatprep.mubr.f32.mxu0 0.0
    %708 = vmatmul.mubr.f32.gmra.mrb[0].mxu0 %v641
    %v709 = vpop.f32.mrb[0].mxu0
    %v710 = vadd.f32 %v637, %v709
    %v711 = vpop.f32.mrb[0].mxu0
    %712 = vdwg.mxu0
    %v713 = vld [vmem:[%s16] sm:$0x1]
    %v715 = vlaneseq
    %v716 = vshrl.u32 %v715, 7
    %v717 = vsub.s32 0, %v716
    %v718 = vrot.slane %v713, %v717
    %v720 = vadd.f32 %v710, %v718
    %v721 = vmax.f32 %v720, 0.0
    %v722 = vld [vmem:[%s17] sm:$0xff]
    %v723 = vld [vmem:[%s17 + $0x8] sm:$0xff]
    %v724 = vld [vmem:[%s17 + $0x10] sm:$0xff]
    %v725 = vld [vmem:[%s17 + $0x18] sm:$0xff]
    %v726 = vld [vmem:[%s18] sm:$0x1]
    %v728 = vlaneseq
    %v729 = vshrl.u32 %v728, 7
    %v730 = vsub.s32 0, %v729
    %v731 = vrot.slane %v726, %v730
    %v734 = vsel %vm163, %v721, 0
    %736 = vmatprep.subr.mxu0 0.0
    %737 = vmatpush1.msra.mxu0 %v722
    %738 = vmatprep.subr.mxu0 0.0
    %739 = vmatpush1.msra.mxu0 %v723
    %740 = vmatprep.subr.mxu0 0.0
    %741 = vmatpush1.msra.mxu0 %v724
    %742 = vmatprep.subr.mxu0 0.0
    %743 = vmatpush1.msra.mxu0 %v725
    %744 = vmatprep.subr.mxu0 0.0
    %745 = vmatpush1.msra.mxu0 0.0
    %746 = vmatprep.subr.mxu0 0.0
    %747 = vmatpush1.msra.mxu0 0.0
    %748 = vmatprep.subr.mxu0 0.0
    %749 = vmatpush1.msra.mxu0 0.0
    %750 = vmatprep.subr.mxu0 0.0
    %751 = vmatpush1.msra.mxu0 0.0
    %752 = vmatprep.subr.mxu0 0.0
    %753 = vmatpush1.msra.mxu0 0.0
    %754 = vmatprep.subr.mxu0 0.0
    %755 = vmatpush1.msra.mxu0 0.0
    %756 = vmatprep.subr.mxu0 0.0
    %757 = vmatpush1.msra.mxu0 0.0
    %758 = vmatprep.subr.mxu0 0.0
    %759 = vmatpush1.msra.mxu0 0.0
    %760 = vmatprep.subr.mxu0 0.0
    %761 = vmatpush1.msra.mxu0 0.0
    %762 = vmatprep.subr.mxu0 0.0
    %763 = vmatpush1.msra.mxu0 0.0
    %764 = vmatprep.subr.mxu0 0.0
    %765 = vmatpush1.msra.mxu0 0.0
    %766 = vmatprep.subr.mxu0 0.0
    %767 = vmatpush1.msra.mxu0 0.0
    %768 = vmatprep.subr.mxu0 0.0
    %769 = vmatpush1.msra.mxu0 0.0
    %770 = vmatprep.subr.mxu0 0.0
    %771 = vmatpush1.msra.mxu0 0.0
    %772 = vmatprep.subr.mxu0 0.0
    %773 = vmatpush1.msra.mxu0 0.0
    %774 = vmatprep.subr.mxu0 0.0
    %775 = vmatpush1.msra.mxu0 0.0
    %776 = vmatprep.subr.mxu0 0.0
    %777 = vmatpush1.msra.mxu0 0.0
    %778 = vmatprep.subr.mxu0 0.0
    %779 = vmatpush1.msra.mxu0 0.0
    %780 = vmatprep.subr.mxu0 0.0
    %781 = vmatpush1.msra.mxu0 0.0
    %782 = vmatprep.subr.mxu0 0.0
    %783 = vmatpush1.msra.mxu0 0.0
    %784 = vmatprep.subr.mxu0 0.0
    %785 = vmatpush1.msra.mxu0 0.0
    %786 = vmatprep.subr.mxu0 0.0
    %787 = vmatpush1.msra.mxu0 0.0
    %788 = vmatprep.subr.mxu0 0.0
    %789 = vmatpush1.msra.mxu0 0.0
    %790 = vmatprep.subr.mxu0 0.0
    %791 = vmatpush1.msra.mxu0 0.0
    %792 = vmatprep.subr.mxu0 0.0
    %793 = vmatpush1.msra.mxu0 0.0
    %794 = vmatprep.subr.mxu0 0.0
    %795 = vmatpush1.msra.mxu0 0.0
    %796 = vmatprep.subr.mxu0 0.0
    %797 = vmatpush1.msra.mxu0 0.0
    %798 = vmatprep.subr.mxu0 0.0
    %799 = vmatpush1.msra.mxu0 0.0
    %800 = vmatprep.mubr.f32.mxu0 0.0
    %801 = vmatmul.mubr.f32.gmra.mrb[0].mxu0 %v734
    %v802 = vpop.f32.mrb[0].mxu0
    %v803 = vadd.f32 %v731, %v802
    %v804 = vpop.f32.mrb[0].mxu0
    %805 = vdwg.mxu0
    %vm806 = vcmask 123904
    %807 = vst.msk [vmem:[#allocation2] sm:$0x3] %vm806, %v803
    %vm808 = vcmask 58368
    %809 = vst.msk [vmem:[#allocation4] sm:$0x3] %vm808, %v479
    %810 = vst.msk [vmem:[#allocation6] sm:$0x3] %vm808, %v564
    // Predicated region
    $region78: #{tpu_custom_call.1} parent=1 // pred_check
      _
    $region79: #{tpu_custom_call.1} parent=1 // pred_check_branch
      %812 = sbr.rel (0) target = $region81
    $region80: #{tpu_custom_call.1} parent=1 // pred_region
      %s814 = ssub.s32 32, 32
      %815 = vsyncadd [#allocation3], %s814
      %s817 = sshll.u32 [#allocation2], 4
      %s818 = int_to_ptr.vmem [resolvable:$true] %s817
      %820 = dma.vmem_to_hbm [thread:$0]  %s818, 32, %s19, [#allocation3]
    $region81: #{tpu_custom_call.1} parent=1 // pred_fallthru
      _
    // Predicated region
    $region82: #{tpu_custom_call.1} parent=1 // pred_check
      _
    $region83: #{tpu_custom_call.1} parent=1 // pred_check_branch
      %822 = sbr.rel (0) target = $region85
    $region84: #{tpu_custom_call.1} parent=1 // pred_region
      %s824 = ssub.s32 32, 32
      %825 = vsyncadd [#allocation5], %s824
      %s827 = sshll.u32 [#allocation4], 4
      %s828 = int_to_ptr.vmem [resolvable:$true] %s827
      %830 = dma.vmem_to_hbm [thread:$0]  %s828, 32, %s20, [#allocation5]
    $region85: #{tpu_custom_call.1} parent=1 // pred_fallthru
      _
    // Predicated region
    $region86: #{tpu_custom_call.1} parent=1 // pred_check
      _
    $region87: #{tpu_custom_call.1} parent=1 // pred_check_branch
      %832 = sbr.rel (0) target = $region89
    $region88: #{tpu_custom_call.1} parent=1 // pred_region
      %s834 = ssub.s32 32, 32
      %835 = vsyncadd [#allocation5], %s834
      %s837 = sshll.u32 [#allocation6], 4
      %s838 = int_to_ptr.vmem [resolvable:$true] %s837
      %840 = dma.vmem_to_hbm [thread:$0]  %s838, 32, %s21, [#allocation5]
    $region89: #{tpu_custom_call.1} parent=1 // pred_fallthru
      _
    // Predicated region
    $region90: #{tpu_custom_call.1} parent=1 // pred_check
      _
    $region91: #{tpu_custom_call.1} parent=1 // pred_check_branch
      %842 = sbr.rel (0) target = $region93
    $region92: #{tpu_custom_call.1} parent=1 // pred_region
      %843 = dma.done [#allocation3], 32
    $region93: #{tpu_custom_call.1} parent=1 // pred_fallthru
      _
    // Predicated region
    $region94: #{tpu_custom_call.1} parent=1 // pred_check
      _
    $region95: #{tpu_custom_call.1} parent=1 // pred_check_branch
      %845 = sbr.rel (0) target = $region97
    $region96: #{tpu_custom_call.1} parent=1 // pred_region
      %846 = dma.done [#allocation5], 32
    $region97: #{tpu_custom_call.1} parent=1 // pred_fallthru
      _
    // Predicated region
    $region98: #{tpu_custom_call.1} parent=1 // pred_check
      _
    $region99: #{tpu_custom_call.1} parent=1 // pred_check_branch
      %848 = sbr.rel (0) target = $region101
    $region100: #{tpu_custom_call.1} parent=1 // pred_region
      %849 = dma.done [#allocation5], 32
    $region101: #{tpu_custom_call.1} parent=1 // pred_fallthru
      _
    %850 = vsyncpa [#allocation3], 1
    %851 = vsyncpa [#allocation5], 1

</llo_original>
